<compile_context>
chip_gen: v7x
topology: tpu7x:2x2x1
jax: 0.10.0
libtpu: 0.0.40
codegen_flags: <defaults>
</compile_context>

<pallas_src>
import jax
import jax.numpy as jnp
from jax import lax
from jax.experimental import pallas as pl
from jax.experimental.pallas import tpu as pltpu


LANE = 128            # TPU lane width: output last dim padded to a multiple of this
_SMALL_BATCH = 512    # below this, a single un-gridded call is cheapest
_BATCH_TILE = 512     # batch tile for the gridded path (tiny VMEM footprint at
                      # classifier-head D; halve if D grows to 4k+ on v7x's 64 MiB VMEM)


def _round_up(n, m):
    return ((n + m - 1) // m) * m


def intent_classifier_kernel(x_ref, w_ref, b_ref, o_ref):
    """o = x @ W^T + b   (dropout with rate 0.0 is the identity, omitted).

    x_ref: (TB, D); w_ref: (N_pad, D) in PyTorch Linear layout; b_ref: (1, N_pad);
    o_ref: (TB, N_pad) lane-dense. Contraction on dim 1 of both operands avoids
    any materialized transpose; accumulation is f32 on the MXU.
    """
    acc = lax.dot_general(
        x_ref[...], w_ref[...],
        dimension_numbers=(((1,), (1,)), ((), ())),
        preferred_element_type=jnp.float32,
    )                                                   # (TB, N_pad) f32
    o_ref[...] = (acc + b_ref[...]).astype(o_ref.dtype)  # VPU bias add, f32 epilogue


def prepare_intent_classifier_params(weight, bias):
    """One-time (init-time) parameter prep.

    Pads the label dim up to a multiple of 128 so the kernel's output slab is
    lane-dense; keeps weight in its (N, D) PyTorch layout (no transpose).
    Returns (w_pad [N_pad, D], b_pad [1, N_pad], num_labels).
    """
    n, d = weight.shape
    n_pad = _round_up(max(n, 1), LANE)
    w_pad = jnp.zeros((n_pad, d), weight.dtype).at[:n, :].set(weight)
    b_pad = jnp.zeros((1, n_pad), bias.dtype).at[0, :n].set(bias)
    return w_pad, b_pad, n


def intent_classifier_forward(x, w_pad, b_pad, num_labels):
    """x: (B, D); w_pad: (N_pad, D); b_pad: (1, N_pad). Returns (B, num_labels)."""
    b_rows, d = x.shape
    n_pad = w_pad.shape[0]

    if b_rows <= _SMALL_BATCH:
        # Single block, no grid: nothing to pipeline, so skip the grid_spec /
        # double-buffer machinery entirely. Whole operands live in VMEM.
        out = pl.pallas_call(
            intent_classifier_kernel,
            out_shape=jax.ShapeDtypeStruct((b_rows, n_pad), x.dtype),
            in_specs=[
                pl.BlockSpec(memory_space=pltpu.MemorySpace.VMEM),
                pl.BlockSpec(memory_space=pltpu.MemorySpace.VMEM),
                pl.BlockSpec(memory_space=pltpu.MemorySpace.VMEM),
            ],
            out_specs=pl.BlockSpec(memory_space=pltpu.MemorySpace.VMEM),
        )(x, w_pad, b_pad)
        return out[:, :num_labels]

    # Large-batch path: tile the batch axis, keep D and N_pad full-extent.
    # "parallel" lets the grid shard across both TensorCores on v7x.
    tile_b = _BATCH_TILE
    b_padded = _round_up(b_rows, tile_b)
    if b_padded != b_rows:
        x = jnp.zeros((b_padded, d), x.dtype).at[:b_rows, :].set(x)

    out = pl.pallas_call(
        intent_classifier_kernel,
        out_shape=jax.ShapeDtypeStruct((b_padded, n_pad), x.dtype),
        grid=(b_padded // tile_b,),
        in_specs=[
            pl.BlockSpec((tile_b, d), lambda i: (i, 0)),
            pl.BlockSpec((n_pad, d), lambda i: (0, 0)),
            pl.BlockSpec((1, n_pad), lambda i: (0, 0)),
        ],
        out_specs=pl.BlockSpec((tile_b, n_pad), lambda i: (i, 0)),
        compiler_params=pltpu.CompilerParams(
            dimension_semantics=("parallel",),
        ),
    )(x, w_pad, b_pad)
    return out[:b_rows, :num_labels]


if __name__ == "__main__":
    # Module config implied by the source:
    #   num_intent_labels = len(intents) = 11, input_dim = hidden size (use 32).
    intents = ['file_search', 'file_open', 'file_share', 'file_download',
               'file_other', 'file_navigate', 'cancel', 'confirm', 'reject',
               'select_none', 'select_more']
    num_intent_labels = len(set(intents))   # 11
    input_dim = 32
    batch = 2

    key = jax.random.PRNGKey(0)
    kx, kw, kb = jax.random.split(key, 3)

    # Deterministic synthetic parameters (PyTorch Linear-style uniform init bound).
    bound = 1.0 / (input_dim ** 0.5)
    weight = jax.random.uniform(kw, (num_intent_labels, input_dim),
                                dtype=jnp.float32, minval=-bound, maxval=bound)
    bias = jax.random.uniform(kb, (num_intent_labels,),
                              dtype=jnp.float32, minval=-bound, maxval=bound)
    x = jax.random.normal(kx, (batch, input_dim), dtype=jnp.float32)

    # One-time parameter prep (lane-dense padding; weight kept untransposed).
    w_pad, b_pad, n_lbl = prepare_intent_classifier_params(weight, bias)

    # Dropout with rate 0.0 is the identity, so no mask is applied.
    out = intent_classifier_forward(x, w_pad, b_pad, n_lbl)
    out = jax.block_until_ready(out)

    ref = x @ weight.T + bias
    assert out.shape == (batch, num_intent_labels)
    assert jnp.allclose(out, ref, atol=1e-5, rtol=1e-5)

    # Also exercise the batch-tiled ("parallel" grid) path with a larger batch.
    x_big = jax.random.normal(kx, (1024 + 3, input_dim), dtype=jnp.float32)
    out_big = jax.block_until_ready(
        intent_classifier_forward(x_big, w_pad, b_pad, n_lbl))
    ref_big = x_big @ weight.T + bias
    assert out_big.shape == (1024 + 3, num_intent_labels)
    assert jnp.allclose(out_big, ref_big, atol=1e-5, rtol=1e-5)

    print("KERNEL_OK")
</pallas_src>

<mosaic_0001>
module attributes {stable_mosaic.version = 11 : i64} {
  func.func @intent_classifier_kernel(%arg0: memref<2x32xf32, #tpu.memory_space<vmem>>, %arg1: memref<128x32xf32, #tpu.memory_space<vmem>>, %arg2: memref<1x128xf32, #tpu.memory_space<vmem>>, %arg3: memref<2x128xf32, #tpu.memory_space<vmem>>) attributes {dimension_semantics = [], scalar_prefetch = 0 : i64, scratch_operands = 0 : i64, tpu.core_type = #tpu.core_type<tc>} {
    %c0 = arith.constant 0 : index
    %c0_0 = arith.constant 0 : index
    %0 = vector.load %arg0[%c0, %c0_0] : memref<2x32xf32, #tpu.memory_space<vmem>>, vector<2x32xf32>
    %c0_1 = arith.constant 0 : index
    %c0_2 = arith.constant 0 : index
    %1 = vector.load %arg1[%c0_1, %c0_2] : memref<128x32xf32, #tpu.memory_space<vmem>>, vector<128x32xf32>
    %cst = arith.constant dense<0.000000e+00> : vector<2x128xf32>
    %2 = tpu.matmul %0, %1, %cst {dimension_numbers = #tpu.dot_dimension_numbers<[1], [1], [0], [0], [0, 0, 1, 0], [], []>} : vector<2x32xf32>, vector<128x32xf32>, vector<2x128xf32> -> vector<2x128xf32>
    %c0_3 = arith.constant 0 : index
    %c0_4 = arith.constant 0 : index
    %3 = vector.load %arg2[%c0_3, %c0_4] : memref<1x128xf32, #tpu.memory_space<vmem>>, vector<1x128xf32>
    %4 = vector.broadcast %3 : vector<1x128xf32> to vector<2x128xf32>
    %5 = arith.addf %2, %4 : vector<2x128xf32>
    %c0_5 = arith.constant 0 : index
    %c0_6 = arith.constant 0 : index
    %6 = vector.load %arg3[%c0_5, %c0_6] : memref<2x128xf32, #tpu.memory_space<vmem>>, vector<2x128xf32>
    tpu.vector_store %arg3[%c0_5, %c0_6], %5 {strides = array<i32>} : memref<2x128xf32, #tpu.memory_space<vmem>>, vector<2x128xf32>,
    return
  }
}

</mosaic_0001>

<llo_original>
// kernel: tpu_custom_call.1
$region0: #{tpu_custom_call.1}
  #allocation0 [shape = 'u32[]', space=smem, size = 0x4, offset = 0x4, fixed_abs, tag = 'smem constant byte address 0x4 - core index']
  #allocation1 [shape = 'u32[144,128]{1,0:T(1,128)}', space=vmem, size = 0x12000, scoped, tag = 'internal scratch']
  %s0 = inlined_call_operand.vmem [shape: f32[2,32], index: 0, kind: input, shape index: {}]
  %s1 = inlined_call_operand.vmem [shape: f32[128,32], index: 1, kind: input, shape index: {}]
  %s2 = inlined_call_operand.vmem [shape: f32[1,128], index: 2, kind: input, shape index: {}]
  %s3 = inlined_call_operand.hbm [shape: f32[2,128], index: 3, kind: output, shape index: {}]
  %s4 = sld [smem:[#allocation0]]
  $region22: #{tpu_custom_call.1} parent=0
    _
  %s6 = ssub.s32 1, %s4
  %s7 = scalar_select 0, %s6, %s4
  $region1: #{tpu_custom_call.1} parent=0
    #allocation2 [shape = 'u8[1024]{0}', space=vmem, size = 0x400, scoped, tag = 'output window, operand 0, single buffered']
    #allocation3 [shape = 's32[1]{0}', space=sflag, size = 0x4, scoped, tag = 'scoped memory for tpu_custom_call.1']
    %8 = vsyncpa [#allocation3], 0
    // Predicated region
    $region2: #{tpu_custom_call.1} parent=1 // pred_check
      _
    $region3: #{tpu_custom_call.1} parent=1 // pred_check_branch
      %10 = sbr.rel (0) target = $region5
    $region4: #{tpu_custom_call.1} parent=1 // pred_region
      _
    $region5: #{tpu_custom_call.1} parent=1 // pred_fallthru
      _
    // Predicated region
    $region6: #{tpu_custom_call.1} parent=1 // pred_check
      _
    $region7: #{tpu_custom_call.1} parent=1 // pred_check_branch
      %12 = sbr.rel (0) target = $region9
    $region8: #{tpu_custom_call.1} parent=1 // pred_region
      _
    $region9: #{tpu_custom_call.1} parent=1 // pred_fallthru
      _
    // Predicated region
    $region10: #{tpu_custom_call.1} parent=1 // pred_check
      _
    $region11: #{tpu_custom_call.1} parent=1 // pred_check_branch
      %14 = sbr.rel (0) target = $region13
    $region12: #{tpu_custom_call.1} parent=1 // pred_region
      _
    $region13: #{tpu_custom_call.1} parent=1 // pred_fallthru
      _
    %v15 = vld [vmem:[%s0] sm:$0x3]
    %v16 = vld [vmem:[%s1] sm:$0xff]
    %v17 = vld [vmem:[%s1 + $0x8] sm:$0xff]
    %v18 = vld [vmem:[%s1 + $0x10] sm:$0xff]
    %v19 = vld [vmem:[%s1 + $0x18] sm:$0xff]
    %v20 = vld [vmem:[%s1 + $0x20] sm:$0xff]
    %v21 = vld [vmem:[%s1 + $0x28] sm:$0xff]
    %v22 = vld [vmem:[%s1 + $0x30] sm:$0xff]
    %v23 = vld [vmem:[%s1 + $0x38] sm:$0xff]
    %v24 = vld [vmem:[%s1 + $0x40] sm:$0xff]
    %v25 = vld [vmem:[%s1 + $0x48] sm:$0xff]
    %v26 = vld [vmem:[%s1 + $0x50] sm:$0xff]
    %v27 = vld [vmem:[%s1 + $0x58] sm:$0xff]
    %v28 = vld [vmem:[%s1 + $0x60] sm:$0xff]
    %v29 = vld [vmem:[%s1 + $0x68] sm:$0xff]
    %v30 = vld [vmem:[%s1 + $0x70] sm:$0xff]
    %v31 = vld [vmem:[%s1 + $0x78] sm:$0xff]
    %v32 = vld [vmem:[%s2] sm:$0x1]
    %v34 = vlaneseq
    %v35 = vshrl.u32 %v34, 7
    %v36 = vsub.s32 0, %v35
    %v37 = vrot.slane %v32, %v36
    %vm39 = vcmask 261120
    %v41 = vsel %vm39, %v15, 0
    %v44 = vsel %vm39, %v16, 0
    %v47 = vsel %vm39, %v17, 0
    %v50 = vsel %vm39, %v18, 0
    %v53 = vsel %vm39, %v19, 0
    %v56 = vsel %vm39, %v20, 0
    %v59 = vsel %vm39, %v21, 0
    %v62 = vsel %vm39, %v22, 0
    %v65 = vsel %vm39, %v23, 0
    %v68 = vsel %vm39, %v24, 0
    %v71 = vsel %vm39, %v25, 0
    %v74 = vsel %vm39, %v26, 0
    %v77 = vsel %vm39, %v27, 0
    %v80 = vsel %vm39, %v28, 0
    %v83 = vsel %vm39, %v29, 0
    %v86 = vsel %vm39, %v30, 0
    %v89 = vsel %vm39, %v31, 0
    %91 = vmatprep.subr.mxu0 0.0
    %92 = vmatpush1.xpose.msra.mxu0 %v44
    %93 = vmatprep.subr.mxu0 0.0
    %94 = vmatpush1.xpose.msra.mxu0 %v47
    %95 = vmatprep.subr.mxu0 0.0
    %96 = vmatpush1.xpose.msra.mxu0 %v50
    %97 = vmatprep.subr.mxu0 0.0
    %98 = vmatpush1.xpose.msra.mxu0 %v53
    %99 = vmatprep.subr.mxu0 0.0
    %100 = vmatpush1.xpose.msra.mxu0 %v56
    %101 = vmatprep.subr.mxu0 0.0
    %102 = vmatpush1.xpose.msra.mxu0 %v59
    %103 = vmatprep.subr.mxu0 0.0
    %104 = vmatpush1.xpose.msra.mxu0 %v62
    %105 = vmatprep.subr.mxu0 0.0
    %106 = vmatpush1.xpose.msra.mxu0 %v65
    %107 = vmatprep.subr.mxu0 0.0
    %108 = vmatpush1.xpose.msra.mxu0 %v68
    %109 = vmatprep.subr.mxu0 0.0
    %110 = vmatpush1.xpose.msra.mxu0 %v71
    %111 = vmatprep.subr.mxu0 0.0
    %112 = vmatpush1.xpose.msra.mxu0 %v74
    %113 = vmatprep.subr.mxu0 0.0
    %114 = vmatpush1.xpose.msra.mxu0 %v77
    %115 = vmatprep.subr.mxu0 0.0
    %116 = vmatpush1.xpose.msra.mxu0 %v80
    %117 = vmatprep.subr.mxu0 0.0
    %118 = vmatpush1.xpose.msra.mxu0 %v83
    %119 = vmatprep.subr.mxu0 0.0
    %120 = vmatpush1.xpose.msra.mxu0 %v86
    %121 = vmatprep.subr.mxu0 0.0
    %122 = vmatpush1.xpose.msra.mxu0 %v89
    %123 = vmatprep.subr.mxu0 0.0
    %124 = vmatpush1.xpose.msra.mxu0 0.0
    %125 = vmatprep.subr.mxu0 0.0
    %126 = vmatpush1.xpose.msra.mxu0 0.0
    %127 = vmatprep.subr.mxu0 0.0
    %128 = vmatpush1.xpose.msra.mxu0 0.0
    %129 = vmatprep.subr.mxu0 0.0
    %130 = vmatpush1.xpose.msra.mxu0 0.0
    %131 = vmatprep.subr.mxu0 0.0
    %132 = vmatpush1.xpose.msra.mxu0 0.0
    %133 = vmatprep.subr.mxu0 0.0
    %134 = vmatpush1.xpose.msra.mxu0 0.0
    %135 = vmatprep.subr.mxu0 0.0
    %136 = vmatpush1.xpose.msra.mxu0 0.0
    %137 = vmatprep.subr.mxu0 0.0
    %138 = vmatpush1.xpose.msra.mxu0 0.0
    %139 = vmatprep.subr.mxu0 0.0
    %140 = vmatpush1.xpose.msra.mxu0 0.0
    %141 = vmatprep.subr.mxu0 0.0
    %142 = vmatpush1.xpose.msra.mxu0 0.0
    %143 = vmatprep.subr.mxu0 0.0
    %144 = vmatpush1.xpose.msra.mxu0 0.0
    %145 = vmatprep.subr.mxu0 0.0
    %146 = vmatpush1.xpose.msra.mxu0 0.0
    %147 = vmatprep.subr.mxu0 0.0
    %148 = vmatpush1.xpose.msra.mxu0 0.0
    %149 = vmatprep.subr.mxu0 0.0
    %150 = vmatpush1.xpose.msra.mxu0 0.0
    %151 = vmatprep.subr.mxu0 0.0
    %152 = vmatpush1.xpose.msra.mxu0 0.0
    %153 = vmatprep.subr.mxu0 0.0
    %154 = vmatpush1.xpose.msra.mxu0 0.0
    %155 = vmatprep.mubr.f32.mxu0 0.0
    %156 = vmatmul.mubr.f32.gmra.mrb[0].mxu0 %v41
    %v157 = vpop.f32.mrb[0].mxu0
    %v158 = vadd.f32 %v37, %v157
    %v159 = vpop.f32.mrb[0].mxu0
    %160 = vdwg.mxu0
    %161 = vst [vmem:[#allocation2] sm:$0x3] %v158
    // Predicated region
    $region14: #{tpu_custom_call.1} parent=1 // pred_check
      _
    $region15: #{tpu_custom_call.1} parent=1 // pred_check_branch
      %163 = sbr.rel (0) target = $region17
    $region16: #{tpu_custom_call.1} parent=1 // pred_region
      %s165 = ssub.s32 32, 32
      %166 = vsyncadd [#allocation3], %s165
      %s168 = sshll.u32 [#allocation2], 4
      %s169 = int_to_ptr.vmem [resolvable:$true] %s168
      %171 = dma.vmem_to_hbm [thread:$0]  %s169, 32, %s3, [#allocation3]
    $region17: #{tpu_custom_call.1} parent=1 // pred_fallthru
      _
    // Predicated region
    $region18: #{tpu_custom_call.1} parent=1 // pred_check
      _
    $region19: #{tpu_custom_call.1} parent=1 // pred_check_branch
      %173 = sbr.rel (0) target = $region21
    $region20: #{tpu_custom_call.1} parent=1 // pred_region
      %174 = dma.done [#allocation3], 32
    $region21: #{tpu_custom_call.1} parent=1 // pred_fallthru
      _
    %175 = vsyncpa [#allocation3], 1

</llo_original>
